<compile_context>
chip_gen: v7x
topology: tpu7x:2x2x1
jax: 0.10.0
libtpu: 0.0.40
codegen_flags: <defaults>
</compile_context>

<pallas_src>
import jax
import jax.numpy as jnp
from jax.experimental import pallas as pl
from jax.experimental.pallas import tpu as pltpu


def _mf_kernel(uid_ref, mid_ref, ut_ref, mt_ref, o_ref):
    # uid_ref / mid_ref : (1, BT)        int32 ids for this batch tile
    # ut_ref            : (F, n_users)   user table, transposed, VMEM-resident
    # mt_ref            : (F, n_movies)  movie table, transposed, VMEM-resident
    # o_ref             : (1, BT)        lane-dense output tile
    n_users = ut_ref.shape[1]
    n_movies = mt_ref.shape[1]
    bt = uid_ref.shape[1]

    # One-hot selection matrices: (n_rows, BT), column b selects row ids[b].
    u_iota = jax.lax.broadcasted_iota(jnp.int32, (n_users, bt), 0)
    m_iota = jax.lax.broadcasted_iota(jnp.int32, (n_movies, bt), 0)
    onehot_u = (u_iota == uid_ref[...]).astype(jnp.float32)
    onehot_m = (m_iota == mid_ref[...]).astype(jnp.float32)

    # Gather via MXU: (F, n_rows) @ (n_rows, BT) -> (F, BT), batch on lanes.
    u_rows = jnp.dot(ut_ref[...], onehot_u, preferred_element_type=jnp.float32)
    m_rows = jnp.dot(mt_ref[...], onehot_m, preferred_element_type=jnp.float32)

    # Elementwise product + factor (sublane) reduce -> (1, BT) lane-dense output.
    o_ref[...] = jnp.sum(u_rows * m_rows, axis=0, keepdims=True)


def matrix_factorization_forward(user_factors, movie_factors, user_ids, movie_ids,
                                 *, block_batch=128):
    """Pallas equivalent of MatrixFactorization.forward(user, movie)."""
    B = user_ids.shape[0]
    n_users, F = user_factors.shape
    n_movies, _ = movie_factors.shape

    # Pad batch to a multiple of the lane-dense tile width (pad ids with row 0;
    # padded outputs are discarded below).
    num_tiles = pl.cdiv(B, block_batch)
    B_pad = num_tiles * block_batch
    uids = jnp.zeros((1, B_pad), jnp.int32).at[0, :B].set(user_ids.astype(jnp.int32))
    mids = jnp.zeros((1, B_pad), jnp.int32).at[0, :B].set(movie_ids.astype(jnp.int32))

    # Transpose tables so factors sit on sublanes and gathered batch sits on lanes.
    ut = user_factors.astype(jnp.float32).T    # (F, n_users)
    mt = movie_factors.astype(jnp.float32).T   # (F, n_movies)

    grid_spec = pltpu.PrefetchScalarGridSpec(
        num_scalar_prefetch=0,
        grid=(num_tiles,),
        in_specs=[
            pl.BlockSpec((1, block_batch), lambda i: (0, i)),   # user ids tile
            pl.BlockSpec((1, block_batch), lambda i: (0, i)),   # movie ids tile
            pl.BlockSpec((F, n_users), lambda i: (0, 0)),       # resident user table
            pl.BlockSpec((F, n_movies), lambda i: (0, 0)),      # resident movie table
        ],
        out_specs=pl.BlockSpec((1, block_batch), lambda i: (0, i)),
    )

    out = pl.pallas_call(
        _mf_kernel,
        out_shape=jax.ShapeDtypeStruct((1, B_pad), jnp.float32),
        grid_spec=grid_spec,
        compiler_params=pltpu.CompilerParams(
            dimension_semantics=("parallel",)),
    )(uids, mids, ut, mt)

    return out[0, :B]


def reference_forward(user_factors, movie_factors, user_ids, movie_ids):
    return jnp.sum(user_factors[user_ids] * movie_factors[movie_ids], axis=1)


if __name__ == "__main__":
    key = jax.random.PRNGKey(0)
    k_u, k_m, k_uid, k_mid = jax.random.split(key, 4)

    n_users, n_movies, n_factors = 64, 96, 20
    batch = 8

    # Deterministic init matching torch: weight.data.uniform_(0, 0.05)
    user_factors = jax.random.uniform(
        k_u, (n_users, n_factors), dtype=jnp.float32, minval=0.0, maxval=0.05)
    movie_factors = jax.random.uniform(
        k_m, (n_movies, n_factors), dtype=jnp.float32, minval=0.0, maxval=0.05)

    user_ids = jax.random.randint(k_uid, (batch,), 0, n_users, dtype=jnp.int32)
    movie_ids = jax.random.randint(k_mid, (batch,), 0, n_movies, dtype=jnp.int32)

    out = matrix_factorization_forward(user_factors, movie_factors,
                                       user_ids, movie_ids)
    out = jax.block_until_ready(out)

    ref = reference_forward(user_factors, movie_factors, user_ids, movie_ids)
    assert out.shape == (batch,)
    assert jnp.allclose(out, ref, atol=1e-5, rtol=1e-5)

    print("KERNEL_OK")
</pallas_src>

<mosaic_0001>
module attributes {stable_mosaic.version = 11 : i64} {
  func.func @_mf_kernel(%arg0: i32, %arg1: memref<1x128xi32, #tpu.memory_space<vmem>>, %arg2: memref<1x128xi32, #tpu.memory_space<vmem>>, %arg3: memref<20x64xf32, #tpu.memory_space<vmem>>, %arg4: memref<20x96xf32, #tpu.memory_space<vmem>>, %arg5: memref<1x128xf32, #tpu.memory_space<vmem>>) attributes {dimension_semantics = [#tpu.dimension_semantics<parallel>], iteration_bounds = array<i64: 1>, scalar_prefetch = 0 : i64, scratch_operands = 0 : i64, tpu.core_type = #tpu.core_type<tc>, window_params = [{transform_indices = @transform_0, window_bounds = array<i64: 1, 128>}, {transform_indices = @transform_1, window_bounds = array<i64: 1, 128>}, {pipeline_mode = #tpu.pipeline_mode<synchronous>, transform_indices = @transform_2, window_bounds = array<i64: 20, 64>}, {pipeline_mode = #tpu.pipeline_mode<synchronous>, transform_indices = @transform_3, window_bounds = array<i64: 20, 96>}, {transform_indices = @transform_4, window_bounds = array<i64: 1, 128>}]} {
    %0 = tpu.iota {dimensions = array<i32: 0>} : vector<64x128xi32>
    %1 = tpu.iota {dimensions = array<i32: 0>} : vector<96x128xi32>
    %c0 = arith.constant 0 : index
    %c0_0 = arith.constant 0 : index
    %2 = vector.load %arg1[%c0, %c0_0] : memref<1x128xi32, #tpu.memory_space<vmem>>, vector<1x128xi32>
    %3 = vector.broadcast %2 : vector<1x128xi32> to vector<64x128xi32>
    %4 = arith.cmpi eq, %0, %3 : vector<64x128xi32>
    %5 = arith.extui %4 : vector<64x128xi1> to vector<64x128xi32>
    %6 = arith.sitofp %5 : vector<64x128xi32> to vector<64x128xf32>
    %c0_1 = arith.constant 0 : index
    %c0_2 = arith.constant 0 : index
    %7 = vector.load %arg2[%c0_1, %c0_2] : memref<1x128xi32, #tpu.memory_space<vmem>>, vector<1x128xi32>
    %8 = vector.broadcast %7 : vector<1x128xi32> to vector<96x128xi32>
    %9 = arith.cmpi eq, %1, %8 : vector<96x128xi32>
    %10 = arith.extui %9 : vector<96x128xi1> to vector<96x128xi32>
    %11 = arith.sitofp %10 : vector<96x128xi32> to vector<96x128xf32>
    %c0_3 = arith.constant 0 : index
    %c0_4 = arith.constant 0 : index
    %12 = vector.load %arg3[%c0_3, %c0_4] : memref<20x64xf32, #tpu.memory_space<vmem>>, vector<20x64xf32>
    %cst = arith.constant dense<0.000000e+00> : vector<20x128xf32>
    %13 = tpu.matmul %12, %6, %cst {dimension_numbers = #tpu.dot_dimension_numbers<[1], [0], [0], [1], [0, 0, 1, 1], [], []>} : vector<20x64xf32>, vector<64x128xf32>, vector<20x128xf32> -> vector<20x128xf32>
    %c0_5 = arith.constant 0 : index
    %c0_6 = arith.constant 0 : index
    %14 = vector.load %arg4[%c0_5, %c0_6] : memref<20x96xf32, #tpu.memory_space<vmem>>, vector<20x96xf32>
    %cst_7 = arith.constant dense<0.000000e+00> : vector<20x128xf32>
    %15 = tpu.matmul %14, %11, %cst_7 {dimension_numbers = #tpu.dot_dimension_numbers<[1], [0], [0], [1], [0, 0, 1, 1], [], []>} : vector<20x96xf32>, vector<96x128xf32>, vector<20x128xf32> -> vector<20x128xf32>
    %16 = arith.mulf %13, %15 : vector<20x128xf32>
    %cst_8 = arith.constant dense<0.000000e+00> : vector<128xf32>
    %17 = vector.multi_reduction <add>, %16, %cst_8 [0] : vector<20x128xf32> to vector<128xf32>
    %18 = vector.shape_cast %17 : vector<128xf32> to vector<1x128xf32>
    %c0_9 = arith.constant 0 : index
    %c0_10 = arith.constant 0 : index
    %19 = vector.load %arg5[%c0_9, %c0_10] : memref<1x128xf32, #tpu.memory_space<vmem>>, vector<1x128xf32>
    tpu.vector_store %arg5[%c0_9, %c0_10], %18 {strides = array<i32>} : memref<1x128xf32, #tpu.memory_space<vmem>>, vector<1x128xf32>,
    return
  }
  func.func @transform_0(%arg0: i32) -> (i32, i32) {
    %c0_i32 = arith.constant 0 : i32
    %c0_i32_0 = arith.constant 0 : i32
    return %c0_i32, %arg0 : i32, i32
  }
  func.func @transform_1(%arg0: i32) -> (i32, i32) {
    %c0_i32 = arith.constant 0 : i32
    %c0_i32_0 = arith.constant 0 : i32
    return %c0_i32, %arg0 : i32, i32
  }
  func.func @transform_2(%arg0: i32) -> (i32, i32) {
    %c0_i32 = arith.constant 0 : i32
    %c0_i32_0 = arith.constant 0 : i32
    %c0_i32_1 = arith.constant 0 : i32
    return %c0_i32, %c0_i32_0 : i32, i32
  }
  func.func @transform_3(%arg0: i32) -> (i32, i32) {
    %c0_i32 = arith.constant 0 : i32
    %c0_i32_0 = arith.constant 0 : i32
    %c0_i32_1 = arith.constant 0 : i32
    return %c0_i32, %c0_i32_0 : i32, i32
  }
  func.func @transform_4(%arg0: i32) -> (i32, i32) {
    %c0_i32 = arith.constant 0 : i32
    %c0_i32_0 = arith.constant 0 : i32
    return %c0_i32, %arg0 : i32, i32
  }
}

</mosaic_0001>

<llo_original>
// kernel: tpu_custom_call.1
$region0: #{tpu_custom_call.1}
  #allocation0 [shape = 'u32[]', space=smem, size = 0x4, offset = 0x4, fixed_abs, tag = 'smem constant byte address 0x4 - core index']
  #allocation1 [shape = 'u32[144,128]{1,0:T(1,128)}', space=vmem, size = 0x12000, scoped, tag = 'internal scratch']
  %s0 = inlined_call_operand.hbm [shape: s32[1,128], index: 0, kind: input, shape index: {}]
  %s1 = inlined_call_operand.vmem [shape: s32[1,128], index: 1, kind: input, shape index: {}]
  %s2 = inlined_call_operand.hbm [shape: f32[20,64], index: 2, kind: input, shape index: {}]
  %s3 = inlined_call_operand.hbm [shape: f32[20,96], index: 3, kind: input, shape index: {}]
  %s4 = inlined_call_operand.hbm [shape: f32[1,128], index: 4, kind: output, shape index: {}]
  %s5 = sld [smem:[#allocation0]]
  $region38: #{tpu_custom_call.1} parent=0
    _
  %s7 = ssub.s32 1, %s5
  %s8 = scalar_select 0, %s7, %s5
  $region1: #{tpu_custom_call.1} parent=0
    #allocation2 [shape = 'u8[512]{0}', space=vmem, size = 0x400, scoped, tag = 'input window, operand 0, single buffered']
    #allocation3 [shape = 's32[1]{0}', space=sflag, size = 0x4, scoped, tag = 'scoped memory for tpu_custom_call.1']
    #allocation4 [shape = 's32[1]{0}', space=sflag, size = 0x4, scoped, tag = 'scoped memory for tpu_custom_call.1']
    #allocation5 [shape = 'u8[12288]{0}', space=vmem, size = 0x3000, scoped, tag = 'input window, operand 2, single buffered']
    #allocation6 [shape = 's32[1]{0}', space=sflag, size = 0x4, scoped, tag = 'scoped memory for tpu_custom_call.1']
    #allocation7 [shape = 'u8[12288]{0}', space=vmem, size = 0x3000, scoped, tag = 'input window, operand 3, single buffered']
    #allocation8 [shape = 'u8[512]{0}', space=vmem, size = 0x400, scoped, tag = 'output window, operand 0, single buffered']
    %9 = vsyncpa [#allocation3], 0
    %10 = vsyncpa [#allocation6], 0
    %11 = vsyncpa [#allocation4], 0
    // Predicated region
    $region2: #{tpu_custom_call.1} parent=1 // pred_check
      _
    $region3: #{tpu_custom_call.1} parent=1 // pred_check_branch
      %13 = sbr.rel (0) target = $region5
    $region4: #{tpu_custom_call.1} parent=1 // pred_region
      %s15 = ssub.s32 16, 16
      %16 = vsyncadd [#allocation3], %s15
      %s18 = sshll.u32 [#allocation2], 4
      %s19 = int_to_ptr.vmem [resolvable:$true] %s18
      %21 = dma.hbm_to_vmem [thread:$0]  %s0, 16, %s19, [#allocation3]
    $region5: #{tpu_custom_call.1} parent=1 // pred_fallthru
      _
    // Predicated region
    $region6: #{tpu_custom_call.1} parent=1 // pred_check
      _
    $region7: #{tpu_custom_call.1} parent=1 // pred_check_branch
      %23 = sbr.rel (0) target = $region9
    $region8: #{tpu_custom_call.1} parent=1 // pred_region
      _
    $region9: #{tpu_custom_call.1} parent=1 // pred_fallthru
      _
    // Predicated region
    $region10: #{tpu_custom_call.1} parent=1 // pred_check
      _
    $region11: #{tpu_custom_call.1} parent=1 // pred_check_branch
      %25 = sbr.rel (0) target = $region13
    $region12: #{tpu_custom_call.1} parent=1 // pred_region
      %s27 = ssub.s32 384, 384
      %28 = vsyncadd [#allocation6], %s27
      %s29 = sshll.u32 [#allocation5], 4
      %s30 = int_to_ptr.vmem [resolvable:$true] %s29
      %35 = dma.hbm_to_vmem [thread:$0]  %s2, 384, %s30, [#allocation6], 128, 128, 8
    $region13: #{tpu_custom_call.1} parent=1 // pred_fallthru
      _
    // Predicated region
    $region14: #{tpu_custom_call.1} parent=1 // pred_check
      _
    $region15: #{tpu_custom_call.1} parent=1 // pred_check_branch
      %37 = sbr.rel (0) target = $region17
    $region16: #{tpu_custom_call.1} parent=1 // pred_region
      %s39 = ssub.s32 384, 384
      %40 = vsyncadd [#allocation6], %s39
      %s41 = sshll.u32 [#allocation7], 4
      %s42 = int_to_ptr.vmem [resolvable:$true] %s41
      %47 = dma.hbm_to_vmem [thread:$0]  %s3, 384, %s42, [#allocation6], 128, 128, 8
    $region17: #{tpu_custom_call.1} parent=1 // pred_fallthru
      _
    // Predicated region
    $region18: #{tpu_custom_call.1} parent=1 // pred_check
      _
    $region19: #{tpu_custom_call.1} parent=1 // pred_check_branch
      %49 = sbr.rel (0) target = $region21
    $region20: #{tpu_custom_call.1} parent=1 // pred_region
      %50 = dma.done [#allocation3], 16
    $region21: #{tpu_custom_call.1} parent=1 // pred_fallthru
      _
    // Predicated region
    $region22: #{tpu_custom_call.1} parent=1 // pred_check
      _
    $region23: #{tpu_custom_call.1} parent=1 // pred_check_branch
      %52 = sbr.rel (0) target = $region25
    $region24: #{tpu_custom_call.1} parent=1 // pred_region
      %53 = dma.done [#allocation6], 384
    $region25: #{tpu_custom_call.1} parent=1 // pred_fallthru
      _
    // Predicated region
    $region26: #{tpu_custom_call.1} parent=1 // pred_check
      _
    $region27: #{tpu_custom_call.1} parent=1 // pred_check_branch
      %55 = sbr.rel (0) target = $region29
    $region28: #{tpu_custom_call.1} parent=1 // pred_region
      %56 = dma.done [#allocation6], 384
    $region29: #{tpu_custom_call.1} parent=1 // pred_fallthru
      _
    %v57 = vlaneseq
    %v58 = vshrl.u32 %v57, 7
    %v59 = vadd.s32 %v58, 8
    %v60 = vadd.s32 %v58, 16
    %v61 = vadd.s32 %v58, 24
    %v62 = vadd.s32 %v58, 32
    %v63 = vadd.s32 %v58, 40
    %v64 = vadd.s32 %v58, 48
    %v65 = vadd.s32 %v58, 56
    %v66 = vadd.s32 %v58, 64
    %v67 = vadd.s32 %v58, 72
    %v68 = vadd.s32 %v58, 80
    %v69 = vadd.s32 %v58, 88
    %v70 = vld [vmem:[#allocation2] sm:$0x1]
    %v71 = vlaneseq
    %v72 = vshrl.u32 %v71, 7
    %v73 = vsub.s32 0, %v72
    %v74 = vrot.slane %v70, %v73
    %vm75 = vcmp.eq.s32.totalorder %v58, %v74
    %vm76 = vcmp.eq.s32.totalorder %v59, %v74
    %vm77 = vcmp.eq.s32.totalorder %v60, %v74
    %vm78 = vcmp.eq.s32.totalorder %v61, %v74
    %vm79 = vcmp.eq.s32.totalorder %v62, %v74
    %vm80 = vcmp.eq.s32.totalorder %v63, %v74
    %vm81 = vcmp.eq.s32.totalorder %v64, %v74
    %vm82 = vcmp.eq.s32.totalorder %v65, %v74
    %v83 = vsel %vm75, 1, 0
    %v84 = vsel %vm76, 1, 0
    %v85 = vsel %vm77, 1, 0
    %v86 = vsel %vm78, 1, 0
    %v87 = vsel %vm79, 1, 0
    %v88 = vsel %vm80, 1, 0
    %v89 = vsel %vm81, 1, 0
    %v90 = vsel %vm82, 1, 0
    %v91 = vcvt.s32.f32 %v83
    %v92 = vcvt.s32.f32 %v84
    %v93 = vcvt.s32.f32 %v85
    %v94 = vcvt.s32.f32 %v86
    %v95 = vcvt.s32.f32 %v87
    %v96 = vcvt.s32.f32 %v88
    %v97 = vcvt.s32.f32 %v89
    %v98 = vcvt.s32.f32 %v90
    %v99 = vld [vmem:[%s1] sm:$0x1]
    %v100 = vlaneseq
    %v101 = vshrl.u32 %v100, 7
    %v102 = vsub.s32 0, %v101
    %v103 = vrot.slane %v99, %v102
    %vm104 = vcmp.eq.s32.totalorder %v58, %v103
    %vm105 = vcmp.eq.s32.totalorder %v59, %v103
    %vm106 = vcmp.eq.s32.totalorder %v60, %v103
    %vm107 = vcmp.eq.s32.totalorder %v61, %v103
    %vm108 = vcmp.eq.s32.totalorder %v62, %v103
    %vm109 = vcmp.eq.s32.totalorder %v63, %v103
    %vm110 = vcmp.eq.s32.totalorder %v64, %v103
    %vm111 = vcmp.eq.s32.totalorder %v65, %v103
    %vm112 = vcmp.eq.s32.totalorder %v66, %v103
    %vm113 = vcmp.eq.s32.totalorder %v67, %v103
    %vm114 = vcmp.eq.s32.totalorder %v68, %v103
    %vm115 = vcmp.eq.s32.totalorder %v69, %v103
    %v116 = vsel %vm104, 1, 0
    %v117 = vsel %vm105, 1, 0
    %v118 = vsel %vm106, 1, 0
    %v119 = vsel %vm107, 1, 0
    %v120 = vsel %vm108, 1, 0
    %v121 = vsel %vm109, 1, 0
    %v122 = vsel %vm110, 1, 0
    %v123 = vsel %vm111, 1, 0
    %v124 = vsel %vm112, 1, 0
    %v125 = vsel %vm113, 1, 0
    %v126 = vsel %vm114, 1, 0
    %v127 = vsel %vm115, 1, 0
    %v128 = vcvt.s32.f32 %v116
    %v129 = vcvt.s32.f32 %v117
    %v130 = vcvt.s32.f32 %v118
    %v131 = vcvt.s32.f32 %v119
    %v132 = vcvt.s32.f32 %v120
    %v133 = vcvt.s32.f32 %v121
    %v134 = vcvt.s32.f32 %v122
    %v135 = vcvt.s32.f32 %v123
    %v136 = vcvt.s32.f32 %v124
    %v137 = vcvt.s32.f32 %v125
    %v138 = vcvt.s32.f32 %v126
    %v139 = vcvt.s32.f32 %v127
    %v140 = vld [vmem:[#allocation5] sm:$0xff]
    %v141 = vld [vmem:[#allocation5 + $0x8] sm:$0xff]
    %v142 = vld [vmem:[#allocation5 + $0x10] sm:$0xf]
    %vm143 = vcmask 523264
    %v145 = vsel %vm143, %v140, 0
    %v148 = vsel %vm143, %v141, 0
    %v151 = vsel %vm143, %v142, 0
    %153 = vmatprep.subr.mxu0 0.0
    %154 = vmatpush1.msra.mxu0 %v91
    %155 = vmatprep.subr.mxu0 0.0
    %156 = vmatpush1.msra.mxu0 %v92
    %157 = vmatprep.subr.mxu0 0.0
    %158 = vmatpush1.msra.mxu0 %v93
    %159 = vmatprep.subr.mxu0 0.0
    %160 = vmatpush1.msra.mxu0 %v94
    %161 = vmatprep.subr.mxu0 0.0
    %162 = vmatpush1.msra.mxu0 %v95
    %163 = vmatprep.subr.mxu0 0.0
    %164 = vmatpush1.msra.mxu0 %v96
    %165 = vmatprep.subr.mxu0 0.0
    %166 = vmatpush1.msra.mxu0 %v97
    %167 = vmatprep.subr.mxu0 0.0
    %168 = vmatpush1.msra.mxu0 %v98
    %169 = vmatprep.subr.mxu0 0.0
    %170 = vmatpush1.msra.mxu0 0.0
    %171 = vmatprep.subr.mxu0 0.0
    %172 = vmatpush1.msra.mxu0 0.0
    %173 = vmatprep.subr.mxu0 0.0
    %174 = vmatpush1.msra.mxu0 0.0
    %175 = vmatprep.subr.mxu0 0.0
    %176 = vmatpush1.msra.mxu0 0.0
    %177 = vmatprep.subr.mxu0 0.0
    %178 = vmatpush1.msra.mxu0 0.0
    %179 = vmatprep.subr.mxu0 0.0
    %180 = vmatpush1.msra.mxu0 0.0
    %181 = vmatprep.subr.mxu0 0.0
    %182 = vmatpush1.msra.mxu0 0.0
    %183 = vmatprep.subr.mxu0 0.0
    %184 = vmatpush1.msra.mxu0 0.0
    %185 = vmatprep.subr.mxu0 0.0
    %186 = vmatpush1.msra.mxu0 0.0
    %187 = vmatprep.subr.mxu0 0.0
    %188 = vmatpush1.msra.mxu0 0.0
    %189 = vmatprep.subr.mxu0 0.0
    %190 = vmatpush1.msra.mxu0 0.0
    %191 = vmatprep.subr.mxu0 0.0
    %192 = vmatpush1.msra.mxu0 0.0
    %193 = vmatprep.subr.mxu0 0.0
    %194 = vmatpush1.msra.mxu0 0.0
    %195 = vmatprep.subr.mxu0 0.0
    %196 = vmatpush1.msra.mxu0 0.0
    %197 = vmatprep.subr.mxu0 0.0
    %198 = vmatpush1.msra.mxu0 0.0
    %199 = vmatprep.subr.mxu0 0.0
    %200 = vmatpush1.msra.mxu0 0.0
    %201 = vmatprep.subr.mxu0 0.0
    %202 = vmatpush1.msra.mxu0 0.0
    %203 = vmatprep.subr.mxu0 0.0
    %204 = vmatpush1.msra.mxu0 0.0
    %205 = vmatprep.subr.mxu0 0.0
    %206 = vmatpush1.msra.mxu0 0.0
    %207 = vmatprep.subr.mxu0 0.0
    %208 = vmatpush1.msra.mxu0 0.0
    %209 = vmatprep.subr.mxu0 0.0
    %210 = vmatpush1.msra.mxu0 0.0
    %211 = vmatprep.subr.mxu0 0.0
    %212 = vmatpush1.msra.mxu0 0.0
    %213 = vmatprep.subr.mxu0 0.0
    %214 = vmatpush1.msra.mxu0 0.0
    %215 = vmatprep.subr.mxu0 0.0
    %216 = vmatpush1.msra.mxu0 0.0
    %217 = vmatprep.mubr.f32.mxu0 0.0
    %218 = vmatmul.mubr.f32.gmra.mrb[0].mxu0 %v145
    %v219 = vpop.f32.mrb[0].mxu0
    %v220 = vadd.f32 0.0, %v219
    %v221 = vpop.f32.mrb[0].mxu0
    %222 = vmatprep.mubr.f32.mxu0 0.0
    %223 = vmatmul.mubr.f32.gmra.mrb[0].mxu0 %v148
    %v224 = vpop.f32.mrb[0].mxu0
    %v225 = vadd.f32 0.0, %v224
    %v226 = vpop.f32.mrb[0].mxu0
    %227 = vmatprep.mubr.f32.mxu0 0.0
    %228 = vmatmul.mubr.f32.gmra.mrb[0].mxu0 %v151
    %v229 = vpop.f32.mrb[0].mxu0
    %v230 = vadd.f32 0.0, %v229
    %v231 = vpop.f32.mrb[0].mxu0
    %232 = vdwg.mxu0
    %v233 = vld [vmem:[#allocation7] sm:$0xff]
    %v234 = vld [vmem:[#allocation7 + $0x8] sm:$0xff]
    %v235 = vld [vmem:[#allocation7 + $0x10] sm:$0xf]
    %vm236 = vcmask 785408
    %v238 = vsel %vm236, %v233, 0
    %v241 = vsel %vm236, %v234, 0
    %v244 = vsel %vm236, %v235, 0
    %246 = vmatprep.subr.mxu0 0.0
    %247 = vmatpush1.msra.mxu0 %v128
    %248 = vmatprep.subr.mxu0 0.0
    %249 = vmatpush1.msra.mxu0 %v129
    %250 = vmatprep.subr.mxu0 0.0
    %251 = vmatpush1.msra.mxu0 %v130
    %252 = vmatprep.subr.mxu0 0.0
    %253 = vmatpush1.msra.mxu0 %v131
    %254 = vmatprep.subr.mxu0 0.0
    %255 = vmatpush1.msra.mxu0 %v132
    %256 = vmatprep.subr.mxu0 0.0
    %257 = vmatpush1.msra.mxu0 %v133
    %258 = vmatprep.subr.mxu0 0.0
    %259 = vmatpush1.msra.mxu0 %v134
    %260 = vmatprep.subr.mxu0 0.0
    %261 = vmatpush1.msra.mxu0 %v135
    %262 = vmatprep.subr.mxu0 0.0
    %263 = vmatpush1.msra.mxu0 %v136
    %264 = vmatprep.subr.mxu0 0.0
    %265 = vmatpush1.msra.mxu0 %v137
    %266 = vmatprep.subr.mxu0 0.0
    %267 = vmatpush1.msra.mxu0 %v138
    %268 = vmatprep.subr.mxu0 0.0
    %269 = vmatpush1.msra.mxu0 %v139
    %270 = vmatprep.subr.mxu0 0.0
    %271 = vmatpush1.msra.mxu0 0.0
    %272 = vmatprep.subr.mxu0 0.0
    %273 = vmatpush1.msra.mxu0 0.0
    %274 = vmatprep.subr.mxu0 0.0
    %275 = vmatpush1.msra.mxu0 0.0
    %276 = vmatprep.subr.mxu0 0.0
    %277 = vmatpush1.msra.mxu0 0.0
    %278 = vmatprep.subr.mxu0 0.0
    %279 = vmatpush1.msra.mxu0 0.0
    %280 = vmatprep.subr.mxu0 0.0
    %281 = vmatpush1.msra.mxu0 0.0
    %282 = vmatprep.subr.mxu0 0.0
    %283 = vmatpush1.msra.mxu0 0.0
    %284 = vmatprep.subr.mxu0 0.0
    %285 = vmatpush1.msra.mxu0 0.0
    %286 = vmatprep.subr.mxu0 0.0
    %287 = vmatpush1.msra.mxu0 0.0
    %288 = vmatprep.subr.mxu0 0.0
    %289 = vmatpush1.msra.mxu0 0.0
    %290 = vmatprep.subr.mxu0 0.0
    %291 = vmatpush1.msra.mxu0 0.0
    %292 = vmatprep.subr.mxu0 0.0
    %293 = vmatpush1.msra.mxu0 0.0
    %294 = vmatprep.subr.mxu0 0.0
    %295 = vmatpush1.msra.mxu0 0.0
    %296 = vmatprep.subr.mxu0 0.0
    %297 = vmatpush1.msra.mxu0 0.0
    %298 = vmatprep.subr.mxu0 0.0
    %299 = vmatpush1.msra.mxu0 0.0
    %300 = vmatprep.subr.mxu0 0.0
    %301 = vmatpush1.msra.mxu0 0.0
    %302 = vmatprep.subr.mxu0 0.0
    %303 = vmatpush1.msra.mxu0 0.0
    %304 = vmatprep.subr.mxu0 0.0
    %305 = vmatpush1.msra.mxu0 0.0
    %306 = vmatprep.subr.mxu0 0.0
    %307 = vmatpush1.msra.mxu0 0.0
    %308 = vmatprep.subr.mxu0 0.0
    %309 = vmatpush1.msra.mxu0 0.0
    %310 = vmatprep.mubr.f32.mxu0 0.0
    %311 = vmatmul.mubr.f32.gmra.mrb[0].mxu0 %v238
    %v312 = vpop.f32.mrb[0].mxu0
    %v313 = vadd.f32 0.0, %v312
    %v314 = vpop.f32.mrb[0].mxu0
    %315 = vmatprep.mubr.f32.mxu0 0.0
    %316 = vmatmul.mubr.f32.gmra.mrb[0].mxu0 %v241
    %v317 = vpop.f32.mrb[0].mxu0
    %v318 = vadd.f32 0.0, %v317
    %v319 = vpop.f32.mrb[0].mxu0
    %320 = vmatprep.mubr.f32.mxu0 0.0
    %321 = vmatmul.mubr.f32.gmra.mrb[0].mxu0 %v244
    %v322 = vpop.f32.mrb[0].mxu0
    %v323 = vadd.f32 0.0, %v322
    %v324 = vpop.f32.mrb[0].mxu0
    %325 = vdwg.mxu0
    %v326 = vmul.f32 %v220, %v313
    %v327 = vmul.f32 %v225, %v318
    %v328 = vmul.f32 %v230, %v323
    %v329 = vadd.f32 %v326, %v327
    %vm330 = vcmask 1043456
    %v331 = vsel %vm330, %v328, 0.0
    %v332 = vadd.f32 %v329, %v331
    %v333 = vrot.slane %v332, 4
    %v334 = vadd.f32 %v332, %v333
    %v335 = vrot.slane %v334, 2
    %v336 = vadd.f32 %v334, %v335
    %v337 = vrot.slane %v336, 1
    %v338 = vadd.f32 %v336, %v337
    %339 = vst [vmem:[#allocation8] sm:$0x1] %v338
    // Predicated region
    $region30: #{tpu_custom_call.1} parent=1 // pred_check
      _
    $region31: #{tpu_custom_call.1} parent=1 // pred_check_branch
      %341 = sbr.rel (0) target = $region33
    $region32: #{tpu_custom_call.1} parent=1 // pred_region
      %s343 = ssub.s32 16, 16
      %344 = vsyncadd [#allocation4], %s343
      %s346 = sshll.u32 [#allocation8], 4
      %s347 = int_to_ptr.vmem [resolvable:$true] %s346
      %349 = dma.vmem_to_hbm [thread:$0]  %s347, 16, %s4, [#allocation4]
    $region33: #{tpu_custom_call.1} parent=1 // pred_fallthru
      _
    // Predicated region
    $region34: #{tpu_custom_call.1} parent=1 // pred_check
      _
    $region35: #{tpu_custom_call.1} parent=1 // pred_check_branch
      %351 = sbr.rel (0) target = $region37
    $region36: #{tpu_custom_call.1} parent=1 // pred_region
      %352 = dma.done [#allocation4], 16
    $region37: #{tpu_custom_call.1} parent=1 // pred_fallthru
      _
    %353 = vsyncpa [#allocation3], 1
    %354 = vsyncpa [#allocation6], 1
    %355 = vsyncpa [#allocation4], 1

</llo_original>
